<compile_context>
chip_gen: v6e
topology: v6e:2x2x1
jax: 0.10.0
libtpu: 0.0.40
codegen_flags: <defaults>
</compile_context>

<pallas_src>
import functools
import math

import jax
import jax.numpy as jnp
import numpy as np
from jax import lax
from jax.experimental import pallas as pl
from jax.experimental.pallas import tpu as pltpu

_LANES = 128
_SUBLANES = 8


def _round_up(x, m):
    return ((x + m - 1) // m) * m


def _focal_loss_kernel(p_ref, t_ref, o_ref, *, alpha, gamma, eps,
                       rows_per_block, acc_rows, k_per, n_valid,
                       tail_block, mask_tail, binary_target):
    c = pl.program_id(0)   # core-split shard of the reduction axis
    k = pl.program_id(2)   # innermost reduction step

    # Zero the resident per-(shard, batch) accumulator on the first step.
    @pl.when(k == 0)
    def _():
        o_ref[...] = jnp.zeros_like(o_ref)

    p = jnp.clip(p_ref[...].astype(jnp.float32), eps, 1.0 - eps)
    t = t_ref[...].astype(jnp.float32)

    pt = p * t + (1.0 - p) * (1.0 - t)
    one_minus_pt = 1.0 - pt

    # Integer-gamma fast path (default gamma=2): jnp.power lowers to
    # exp(gamma*log(x)) = 2 extra EUP ops/element on the single EUP slot.
    if float(gamma).is_integer() and 0 <= int(gamma) <= 8:
        fw = jnp.ones_like(one_minus_pt)
        for _ in range(int(gamma)):
            fw = fw * one_minus_pt
    else:
        fw = jnp.power(one_minus_pt, gamma)

    if binary_target:
        # One-log form, exact only for hard 0/1 targets.
        bce = jnp.log(jnp.clip(pt, eps, 1.0))
    else:
        bce = t * jnp.log(p) + (1.0 - t) * jnp.log(1.0 - p)
    loss = (-alpha * fw) * bce

    def _accum(l):
        # (R, 128) -> (R//acc_rows, acc_rows, 128): acc_rows/8 independent
        # vreg add chains into the resident lane/sublane-dense accumulator
        # (pure VPU, no XLU cross-lane reduce, no masked sub-128 stores).
        o_ref[...] += jnp.sum(
            l.reshape(rows_per_block // acc_rows, acc_rows, _LANES), axis=0)

    if not mask_tail:
        _accum(loss)
    else:
        # Fallback (non-default eps): mask only the block(s) that contain the
        # zero-padded tail; all other steps take the unmasked path.
        gb = c * k_per + k   # global block index along the row axis

        @pl.when(gb < tail_block)
        def _():
            _accum(loss)

        @pl.when(gb >= tail_block)
        def _():
            row = lax.broadcasted_iota(jnp.int32, loss.shape, 0)
            lane = lax.broadcasted_iota(jnp.int32, loss.shape, 1)
            flat = (gb * rows_per_block + row) * _LANES + lane
            _accum(jnp.where(flat < n_valid, loss, 0.0))


def focal_loss(predict, target, *, alpha=1.0, gamma=2.0, eps=1e-10,
               rows_per_block=4096, binary_target=False):
    """Pallas FocalLoss forward. predict/target: (B, ...); returns (B,) f32."""
    assert predict.shape == target.shape
    B = target.shape[0]
    N = math.prod(target.shape[1:]) if target.ndim > 1 else 1
    rows = pl.cdiv(N, _LANES)

    # Sublane-packing granularity per input dtype: f32->8, bf16->16, int8->32.
    def _row_mult(dt):
        return _SUBLANES * max(1, 4 // jnp.dtype(dt).itemsize)

    base_mult = max(_row_mult(predict.dtype), _row_mult(target.dtype))
    # Wide accumulator (64,128) = 8 vregs for VALU ILP; tiny inputs keep the
    # minimum packing granularity to avoid padding a handful of rows to 64.
    acc_rows = 64 if rows >= 64 else base_mult
    r_mult = max(acc_rows, base_mult)

    # Occupy both v7x TensorCores when the batch axis can't be split.
    cs = 2 if (B == 1 and rows >= 2 * r_mult) else 1

    # Adaptive R so rows_padded ~= rows (minimal / usually zero padding).
    num_k = max(cs, pl.cdiv(rows, max(1, int(rows_per_block))))
    R = max(r_mult, _round_up(pl.cdiv(rows, num_k), r_mult))
    num_k = _round_up(pl.cdiv(rows, R), cs)
    k_per = num_k // cs
    rows_padded = num_k * R
    n_padded = rows_padded * _LANES

    # Exact-zero padding guard: with eps=1e-10, (1.0 - eps) rounds to 1.0 in
    # f32, so zero-padded (p=0, t=0) elements contribute exactly 0 loss with
    # no inf/NaN -> no in-kernel tail mask needed. Otherwise keep the mask.
    exact_zero_pad = bool(np.float32(1.0) - np.float32(eps) == np.float32(1.0))
    mask_tail = (n_padded != N) and not exact_zero_pad
    if mask_tail:
        assert N < 2**31, "int32 flat index would overflow in the mask path"
    tail_block = N // (R * _LANES)

    # Lane/sublane-dense layout: (B, N) -> (B, rows_padded, 128).
    p2d = predict.reshape(B, N)
    t2d = target.reshape(B, N)
    if n_padded != N:
        pad = ((0, 0), (0, n_padded - N))
        p2d = jnp.pad(p2d, pad)   # zero padding (exact-zero loss on default path)
        t2d = jnp.pad(t2d, pad)
    p3d = p2d.reshape(B, rows_padded, _LANES)
    t3d = t2d.reshape(B, rows_padded, _LANES)

    kernel = functools.partial(
        _focal_loss_kernel,
        alpha=float(alpha), gamma=float(gamma), eps=float(eps),
        rows_per_block=R, acc_rows=acc_rows, k_per=k_per, n_valid=N,
        tail_block=tail_block, mask_tail=mask_tail,
        binary_target=bool(binary_target))

    # VMEM: 2 pipeline buffers x (both input blocks) + accumulator + slack.
    # With defaults this stays at the 32 MiB scoped default (v7x-safe).
    blk_bytes = R * _LANES * (jnp.dtype(predict.dtype).itemsize
                              + jnp.dtype(target.dtype).itemsize)
    vmem_limit = int(max(32 * 1024 * 1024, 2 * blk_bytes + 4 * 1024 * 1024))

    out = pl.pallas_call(
        kernel,
        out_shape=jax.ShapeDtypeStruct((cs * B, acc_rows, _LANES), jnp.float32),
        grid_spec=pltpu.PrefetchScalarGridSpec(
            num_scalar_prefetch=0,
            grid=(cs, B, k_per),
            in_specs=[
                pl.BlockSpec((None, R, _LANES),
                             lambda c, b, k: (b, c * k_per + k, 0)),
                pl.BlockSpec((None, R, _LANES),
                             lambda c, b, k: (b, c * k_per + k, 0)),
            ],
            out_specs=pl.BlockSpec((None, acc_rows, _LANES),
                                   lambda c, b, k: (c * B + b, 0, 0)),
        ),
        compiler_params=pltpu.CompilerParams(
            dimension_semantics=("parallel", "parallel", "arbitrary"),
            vmem_limit_bytes=vmem_limit,
        ),
    )(p3d, t3d)

    # Tiny (cs, B, acc_rows, 128) -> (B,) finalization outside the kernel.
    return jnp.sum(out.reshape(cs, B, acc_rows, _LANES), axis=(0, 2, 3))


def focal_loss_ref(predict, target, *, alpha=1.0, gamma=2.0, eps=1e-10):
    B = target.shape[0]
    p = jnp.clip(predict.astype(jnp.float32), eps, 1.0 - eps)
    t = target.astype(jnp.float32)
    pt = p * t + (1.0 - p) * (1.0 - t)
    fw = alpha * (1.0 - pt) ** gamma
    loss = -fw * (t * jnp.log(p) + (1.0 - t) * jnp.log(1.0 - p))
    return jnp.sum(loss.reshape(B, -1), axis=1)


if __name__ == "__main__":
    # Case 1: shapes from the module spec (B, C, H, W) = (2, 4, 16, 16).
    B, C, H, W = 2, 4, 16, 16
    kp, kt = jax.random.split(jax.random.PRNGKey(0))
    predict = jax.nn.sigmoid(jax.random.normal(kp, (B, C, H, W), dtype=jnp.float32))
    target = jax.random.bernoulli(kt, p=0.3, shape=(B, C, H, W)).astype(jnp.float32)

    out = jax.block_until_ready(focal_loss(predict, target, alpha=1.0, gamma=2.0, eps=1e-10))
    ref = focal_loss_ref(predict, target, alpha=1.0, gamma=2.0, eps=1e-10)
    assert out.shape == (B,)
    assert jnp.allclose(out, ref, rtol=1e-5, atol=1e-4), (out, ref)

    # Case 2: feature count not a multiple of 128 -> padded tail, default eps
    # (exact-zero padding path, no in-kernel mask).
    B2, C2, H2, W2 = 2, 3, 17, 19
    kp2, kt2 = jax.random.split(jax.random.PRNGKey(1))
    predict2 = jax.nn.sigmoid(jax.random.normal(kp2, (B2, C2, H2, W2), dtype=jnp.float32))
    target2 = jax.random.bernoulli(kt2, p=0.3, shape=(B2, C2, H2, W2)).astype(jnp.float32)

    out2 = jax.block_until_ready(focal_loss(predict2, target2))
    ref2 = focal_loss_ref(predict2, target2)
    assert jnp.allclose(out2, ref2, rtol=1e-5, atol=1e-4), (out2, ref2)

    # Case 3: non-default eps (1-eps != 1 in f32) exercises the gated mask fallback.
    out3 = jax.block_until_ready(focal_loss(predict2, target2, eps=1e-3))
    ref3 = focal_loss_ref(predict2, target2, eps=1e-3)
    assert jnp.allclose(out3, ref3, rtol=1e-5, atol=1e-4), (out3, ref3)

    # Case 4: B == 1 exercises the dual-core split of the reduction axis.
    B4, C4, H4, W4 = 1, 4, 64, 64
    kp4, kt4 = jax.random.split(jax.random.PRNGKey(2))
    predict4 = jax.nn.sigmoid(jax.random.normal(kp4, (B4, C4, H4, W4), dtype=jnp.float32))
    target4 = jax.random.bernoulli(kt4, p=0.3, shape=(B4, C4, H4, W4)).astype(jnp.float32)

    out4 = jax.block_until_ready(focal_loss(predict4, target4))
    ref4 = focal_loss_ref(predict4, target4)
    assert jnp.allclose(out4, ref4, rtol=1e-5, atol=1e-4), (out4, ref4)

    print("KERNEL_OK")
</pallas_src>

<mosaic_0001>
module attributes {stable_mosaic.version = 11 : i64} {
  func.func @_focal_loss_kernel(%arg0: i32, %arg1: i32, %arg2: i32, %arg3: memref<1x8x128xf32, #tpu.memory_space<vmem>>, %arg4: memref<1x8x128xf32, #tpu.memory_space<vmem>>, %arg5: memref<1x8x128xf32, #tpu.memory_space<vmem>>) attributes {dimension_semantics = [#tpu.dimension_semantics<parallel>, #tpu.dimension_semantics<parallel>, #tpu.dimension_semantics<arbitrary>], iteration_bounds = array<i64: 1, 2, 1>, scalar_prefetch = 0 : i64, scratch_operands = 0 : i64, tpu.core_type = #tpu.core_type<tc>, window_params = [{transform_indices = @transform_0, window_bounds = array<i64: 1, 8, 128>}, {transform_indices = @transform_1, window_bounds = array<i64: 1, 8, 128>}, {transform_indices = @transform_2, window_bounds = array<i64: 1, 8, 128>}]} {
    %c0_i32 = arith.constant 0 : i32
    %0 = arith.cmpi eq, %arg2, %c0_i32 : i32
    %1 = arith.extui %0 : i1 to i32
    %c0_i32_0 = arith.constant 0 : i32
    %2 = arith.cmpi ne, %1, %c0_i32_0 : i32
    scf.if %2 {
      %cst_21 = arith.constant 0.000000e+00 : f32
      %43 = vector.broadcast %cst_21 : f32 to vector<8x128xf32>
      %c0_22 = arith.constant 0 : index
      %c0_23 = arith.constant 0 : index
      %c0_24 = arith.constant 0 : index
      %44 = vector.load %arg5[%c0_22, %c0_23, %c0_24] : memref<1x8x128xf32, #tpu.memory_space<vmem>>, vector<1x8x128xf32>
      %45 = vector.shape_cast %44 : vector<1x8x128xf32> to vector<8x128xf32>
      %46 = vector.shape_cast %43 : vector<8x128xf32> to vector<1x8x128xf32>
      tpu.vector_store %arg5[%c0_22, %c0_23, %c0_24], %46 {strides = array<i32>} : memref<1x8x128xf32, #tpu.memory_space<vmem>>, vector<1x8x128xf32>,
    } else {
    }
    %c0 = arith.constant 0 : index
    %c0_1 = arith.constant 0 : index
    %c0_2 = arith.constant 0 : index
    %3 = vector.load %arg3[%c0, %c0_1, %c0_2] : memref<1x8x128xf32, #tpu.memory_space<vmem>>, vector<1x8x128xf32>
    %4 = vector.shape_cast %3 : vector<1x8x128xf32> to vector<8x128xf32>
    %cst = arith.constant 1.000000e-10 : f32
    %cst_3 = arith.constant 1.000000e+00 : f32
    %5 = vector.broadcast %cst : f32 to vector<8x128xf32>
    %6 = arith.maximumf %5, %4 : vector<8x128xf32>
    %7 = vector.broadcast %cst_3 : f32 to vector<8x128xf32>
    %8 = arith.minimumf %7, %6 : vector<8x128xf32>
    %c0_4 = arith.constant 0 : index
    %c0_5 = arith.constant 0 : index
    %c0_6 = arith.constant 0 : index
    %9 = vector.load %arg4[%c0_4, %c0_5, %c0_6] : memref<1x8x128xf32, #tpu.memory_space<vmem>>, vector<1x8x128xf32>
    %10 = vector.shape_cast %9 : vector<1x8x128xf32> to vector<8x128xf32>
    %11 = arith.mulf %8, %10 : vector<8x128xf32>
    %cst_7 = arith.constant 1.000000e+00 : f32
    %12 = vector.broadcast %cst_7 : f32 to vector<8x128xf32>
    %13 = arith.subf %12, %8 : vector<8x128xf32>
    %cst_8 = arith.constant 1.000000e+00 : f32
    %14 = vector.broadcast %cst_8 : f32 to vector<8x128xf32>
    %15 = arith.subf %14, %10 : vector<8x128xf32>
    %16 = arith.mulf %13, %15 : vector<8x128xf32>
    %17 = arith.addf %11, %16 : vector<8x128xf32>
    %cst_9 = arith.constant 1.000000e+00 : f32
    %18 = vector.broadcast %cst_9 : f32 to vector<8x128xf32>
    %19 = arith.subf %18, %17 : vector<8x128xf32>
    %cst_10 = arith.constant 1.000000e+00 : f32
    %20 = vector.broadcast %cst_10 : f32 to vector<8x128xf32>
    %21 = arith.mulf %20, %19 : vector<8x128xf32>
    %22 = arith.mulf %21, %19 : vector<8x128xf32>
    %23 = math.log %8 : vector<8x128xf32>
    %24 = arith.mulf %10, %23 : vector<8x128xf32>
    %cst_11 = arith.constant 1.000000e+00 : f32
    %25 = vector.broadcast %cst_11 : f32 to vector<8x128xf32>
    %26 = arith.subf %25, %10 : vector<8x128xf32>
    %cst_12 = arith.constant 1.000000e+00 : f32
    %27 = vector.broadcast %cst_12 : f32 to vector<8x128xf32>
    %28 = arith.subf %27, %8 : vector<8x128xf32>
    %29 = math.log %28 : vector<8x128xf32>
    %30 = arith.mulf %26, %29 : vector<8x128xf32>
    %31 = arith.addf %24, %30 : vector<8x128xf32>
    %cst_13 = arith.constant -1.000000e+00 : f32
    %32 = vector.broadcast %cst_13 : f32 to vector<8x128xf32>
    %33 = arith.mulf %32, %22 : vector<8x128xf32>
    %34 = arith.mulf %33, %31 : vector<8x128xf32>
    %c0_14 = arith.constant 0 : index
    %c0_15 = arith.constant 0 : index
    %c0_16 = arith.constant 0 : index
    %35 = vector.load %arg5[%c0_14, %c0_15, %c0_16] : memref<1x8x128xf32, #tpu.memory_space<vmem>>, vector<1x8x128xf32>
    %36 = vector.shape_cast %35 : vector<1x8x128xf32> to vector<8x128xf32>
    %37 = vector.shape_cast %34 : vector<8x128xf32> to vector<1x8x128xf32>
    %cst_17 = arith.constant dense<0.000000e+00> : vector<8x128xf32>
    %38 = vector.multi_reduction <add>, %37, %cst_17 [0] : vector<1x8x128xf32> to vector<8x128xf32>
    %39 = arith.addf %36, %38 : vector<8x128xf32>
    %c0_18 = arith.constant 0 : index
    %c0_19 = arith.constant 0 : index
    %c0_20 = arith.constant 0 : index
    %40 = vector.load %arg5[%c0_18, %c0_19, %c0_20] : memref<1x8x128xf32, #tpu.memory_space<vmem>>, vector<1x8x128xf32>
    %41 = vector.shape_cast %40 : vector<1x8x128xf32> to vector<8x128xf32>
    %42 = vector.shape_cast %39 : vector<8x128xf32> to vector<1x8x128xf32>
    tpu.vector_store %arg5[%c0_18, %c0_19, %c0_20], %42 {strides = array<i32>} : memref<1x8x128xf32, #tpu.memory_space<vmem>>, vector<1x8x128xf32>,
    return
  }
  func.func @transform_0(%arg0: i32, %arg1: i32, %arg2: i32) -> (i32, i32, i32) {
    %c1_i32 = arith.constant 1 : i32
    %0 = arith.muli %arg0, %c1_i32 : i32
    %1 = arith.addi %0, %arg2 : i32
    %c0_i32 = arith.constant 0 : i32
    %c0_i32_0 = arith.constant 0 : i32
    return %arg1, %1, %c0_i32 : i32, i32, i32
  }
  func.func @transform_1(%arg0: i32, %arg1: i32, %arg2: i32) -> (i32, i32, i32) {
    %c1_i32 = arith.constant 1 : i32
    %0 = arith.muli %arg0, %c1_i32 : i32
    %1 = arith.addi %0, %arg2 : i32
    %c0_i32 = arith.constant 0 : i32
    %c0_i32_0 = arith.constant 0 : i32
    return %arg1, %1, %c0_i32 : i32, i32, i32
  }
  func.func @transform_2(%arg0: i32, %arg1: i32, %arg2: i32) -> (i32, i32, i32) {
    %c2_i32 = arith.constant 2 : i32
    %0 = arith.muli %arg0, %c2_i32 : i32
    %1 = arith.addi %0, %arg1 : i32
    %c0_i32 = arith.constant 0 : i32
    %c0_i32_0 = arith.constant 0 : i32
    %c0_i32_1 = arith.constant 0 : i32
    return %1, %c0_i32, %c0_i32_0 : i32, i32, i32
  }
}

</mosaic_0001>

<llo_original>
// kernel: tpu_custom_call.1
$region0: #{tpu_custom_call.1}
  #allocation0 [shape = 'u32[]', space=smem, size = 0x4, offset = 0x4, fixed_abs, tag = 'smem constant byte address 0x4 - core index']
  #allocation1 [shape = 'u32[144,128]{1,0:T(1,128)}', space=vmem, size = 0x12000, scoped, tag = 'internal scratch']
  %s0 = inlined_call_operand.hbm [shape: f32[2,8,128], index: 0, kind: input, shape index: {}]
  %s1 = inlined_call_operand.hbm [shape: f32[2,8,128], index: 1, kind: input, shape index: {}]
  %s2 = inlined_call_operand.hbm [shape: f32[2,8,128], index: 2, kind: output, shape index: {}]
  %s3 = sld [smem:[#allocation0]]
  $region53: #{tpu_custom_call.1} parent=0
    _
  %s5 = ssub.s32 1, %s3
  %s6 = scalar_select 0, %s5, %s3
  $region1: #{tpu_custom_call.1} parent=0
    #allocation2 [shape = 'u8[8192]{0}', space=vmem, size = 0x2000, scoped, tag = 'input window, operand 0']
    #allocation3 [shape = 's32[2]{0}', space=sflag, size = 0x8, scoped, tag = 'scoped memory for tpu_custom_call.1']
    #allocation4 [shape = 's32[2]{0}', space=sflag, size = 0x8, scoped, tag = 'scoped memory for tpu_custom_call.1']
    #allocation5 [shape = 'u8[8192]{0}', space=vmem, size = 0x2000, scoped, tag = 'input window, operand 1']
    #allocation6 [shape = 's32[2]{0}', space=sflag, size = 0x8, scoped, tag = 'scoped memory for tpu_custom_call.1']
    #allocation7 [shape = 'u8[8192]{0}', space=vmem, size = 0x2000, scoped, tag = 'output window, operand 0']
    %7 = vsyncpa [#allocation3], 0
    %s8 = scalar_lea.sflag [#allocation3], 1
    %9 = vsyncpa %s8, 0
    %10 = vsyncpa [#allocation6], 0
    %s11 = scalar_lea.sflag [#allocation6], 1
    %12 = vsyncpa %s11, 0
    %13 = vsyncpa [#allocation4], 0
    %s14 = scalar_lea.sflag [#allocation4], 1
    %15 = vsyncpa %s14, 0
    loop: start=0, step=1, limit=4
    $region2: #{tpu_custom_call.1} parent=1 // loop_pre_header
      _
    $region3: #{tpu_custom_call.1} parent=1 // loop_header
      %s17 = sphi 0, %s21
      %p18 = scmp.ge.s32.totalorder %s17, 4
      %s24 = sphi 0, %s43
      %s25 = sphi 0, %s39
      %s26 = sphi 0, %s35
      %s27 = sphi 0, %s24
      %s28 = sphi 0, %s25
      %s29 = sphi 0, %s26
      %s30 = sphi 0, %s27
      %s31 = sphi 0, %s28
      %s32 = sphi 0, %s29
      %s50 = sphi 0, %s52
      %s53 = sphi 0, %s50
      %s54 = sphi 0, %s53
      %s70 = sphi 0, %s54
      %s80 = sphi 0, %s82
      %s83 = sphi 0, %s80
      %s84 = sphi 0, %s83
      %s100 = sphi 0, %s84
      %s110 = sphi 0, %s112
      %s113 = sphi 0, %s110
      %s114 = sphi 0, %s113
      %s130 = sphi 0, %s114
    $region4: #{tpu_custom_call.1} parent=1 // loop_header_branch
      %20 = sbr.rel (%p18) target = $region8
    $region5: #{tpu_custom_call.1} parent=1 // loop_body
      %s22 = ssub.s32 %s17, 1
      %s23 = ssub.s32 %s17, 2
      %s33 = sadd.s32 1, %s26
      %p34 = scmp.ge.s32.totalorder %s33, 1
      %s35 = scalar_select %p34, 0, %s33
      %s36 = sadd.s32 1, %s25
      %s37 = scalar_select %p34, %s36, %s25
      %p38 = scmp.ge.s32.totalorder %s37, 2
      %s39 = scalar_select %p38, 0, %s37
      %s40 = sadd.s32 1, %s24
      %s41 = scalar_select %p38, %s40, %s24
      %p42 = scmp.ge.s32.totalorder %s41, 1
      %s43 = scalar_select %p42, 0, %s41
      %s44 = sadd.s32 %s24, %s26
      %s45 = sadd.s32 %s43, %s35
      %s46 = ssub.s32 %s25, %s39
      %s47 = ssub.s32 %s44, %s45
      %s48 = sor.u32 %s46, %s47
      %p49 = scmp.eq.s32.totalorder %s48, 0
      %s51 = sadd.s32 %s50, 1
      %s52 = scalar_select %p49, %s50, %s51
      %p55 = pneg %p49
      %p56 = scmp.eq.s32.totalorder %s17, 1
      %p57 = por %p55, %p56
      %p58 = scmp.ne.s32.totalorder %s50, %s53
      %p59 = scmp.eq.s32.totalorder %s17, 0
      %p60 = por %p58, %p59
      %p61 = scmp.ne.s32.totalorder %s50, %s53
      %p62 = scmp.eq.s32.totalorder %s22, 1
      %p63 = por %p61, %p62
      %p64 = scmp.ne.s32.totalorder %s53, %s54
      %p65 = scmp.eq.s32.totalorder %s22, 0
      %p66 = por %p64, %p65
      %p67 = scmp.ne.s32.totalorder %s53, %s54
      %p68 = scmp.eq.s32.totalorder %s23, 1
      %p69 = por %p67, %p68
      %p71 = scmp.ne.s32.totalorder %s54, %s70
      %p72 = scmp.eq.s32.totalorder %s23, 0
      %p73 = por %p71, %p72
      %s74 = sadd.s32 %s24, %s26
      %s75 = sadd.s32 %s43, %s35
      %s76 = ssub.s32 %s25, %s39
      %s77 = ssub.s32 %s74, %s75
      %s78 = sor.u32 %s76, %s77
      %p79 = scmp.eq.s32.totalorder %s78, 0
      %s81 = sadd.s32 %s80, 1
      %s82 = scalar_select %p79, %s80, %s81
      %p85 = pneg %p79
      %p86 = scmp.eq.s32.totalorder %s17, 1
      %p87 = por %p85, %p86
      %p88 = scmp.ne.s32.totalorder %s80, %s83
      %p89 = scmp.eq.s32.totalorder %s17, 0
      %p90 = por %p88, %p89
      %p91 = scmp.ne.s32.totalorder %s80, %s83
      %p92 = scmp.eq.s32.totalorder %s22, 1
      %p93 = por %p91, %p92
      %p94 = scmp.ne.s32.totalorder %s83, %s84
      %p95 = scmp.eq.s32.totalorder %s22, 0
      %p96 = por %p94, %p95
      %p97 = scmp.ne.s32.totalorder %s83, %s84
      %p98 = scmp.eq.s32.totalorder %s23, 1
      %p99 = por %p97, %p98
      %p101 = scmp.ne.s32.totalorder %s84, %s100
      %p102 = scmp.eq.s32.totalorder %s23, 0
      %p103 = por %p101, %p102
      %s104 = smul.u32 %s24, 2
      %s105 = sadd.s32 %s104, %s25
      %s106 = smul.u32 %s43, 2
      %s107 = sadd.s32 %s106, %s39
      %s108 = ssub.s32 %s105, %s107
      %p109 = scmp.eq.s32.totalorder %s108, 0
      %s111 = sadd.s32 %s110, 1
      %s112 = scalar_select %p109, %s110, %s111
      %p115 = pneg %p109
      %p116 = scmp.eq.s32.totalorder %s17, 1
      %p117 = por %p115, %p116
      %p118 = scmp.ne.s32.totalorder %s110, %s113
      %p119 = scmp.eq.s32.totalorder %s17, 0
      %p120 = por %p118, %p119
      %p121 = scmp.ne.s32.totalorder %s110, %s113
      %p122 = scmp.eq.s32.totalorder %s22, 1
      %p123 = por %p121, %p122
      %p124 = scmp.ne.s32.totalorder %s113, %s114
      %p125 = scmp.eq.s32.totalorder %s22, 0
      %p126 = por %p124, %p125
      %p127 = scmp.ne.s32.totalorder %s113, %s114
      %p128 = scmp.eq.s32.totalorder %s23, 1
      %p129 = por %p127, %p128
      %p131 = scmp.ne.s32.totalorder %s114, %s130
      %p132 = scmp.eq.s32.totalorder %s23, 0
      %p133 = por %p131, %p132
      %p134 = scmp.le.s32.totalorder 1, %s17
      %p135 = scmp.lt.s32.totalorder %s17, 3
      %p136 = pnand %p134, %p135
      %p137 = pneg %p136
      // Predicated region
      $region9: #{tpu_custom_call.1} parent=5 // pred_check
        _
      $region10: #{tpu_custom_call.1} parent=5 // pred_check_branch
        %139 = sbr.rel (%p136) target = $region12
      $region11: #{tpu_custom_call.1} parent=5 // pred_region
        %s140 = ssub.s32 %s17, 1
      $region12: #{tpu_custom_call.1} parent=5 // pred_fallthru
        _
      %p141 = scmp.lt.s32.totalorder %s17, 2
      // Predicated region
      $region13: #{tpu_custom_call.1} parent=5 // pred_check
        %p142 = pneg %p141
      $region14: #{tpu_custom_call.1} parent=5 // pred_check_branch
        %144 = sbr.rel (%p142) target = $region16
      $region15: #{tpu_custom_call.1} parent=5 // pred_region
        // Predicated region
        $region17: #{tpu_custom_call.1} parent=15 // pred_check
          %p145 = pneg %p60
        $region18: #{tpu_custom_call.1} parent=15 // pred_check_branch
          %147 = sbr.rel (%p145) target = $region20
        $region19: #{tpu_custom_call.1} parent=15 // pred_region
          %s148 = sand.u32 %s50, 1
          %s149 = scalar_lea.sflag [#allocation3], %s148
          %s150 = sand.u32 %s50, 1
          %s151 = smul.addr %s150, 8
          %s152 = scalar_lea.vmem [#allocation2], %s151
          %s153 = sadd.s32 %s24, %s26
          %s155 = ssub.s32 128, 128
          %156 = vsyncadd %s149, %s155
          %s157 = sadd.s32 %s153, %s25
          %s158 = smul.addr %s157, 128
          %s159 = scalar_lea.hbm %s0, %s158
          %s161 = sshll.u32 %s152, 4
          %s162 = int_to_ptr.vmem [resolvable:$true] %s161
          %164 = dma.hbm_to_vmem [thread:$0]  %s159, 128, %s162, %s149
        $region20: #{tpu_custom_call.1} parent=15 // pred_fallthru
          _
        // Predicated region
        $region21: #{tpu_custom_call.1} parent=15 // pred_check
          %p165 = pneg %p90
        $region22: #{tpu_custom_call.1} parent=15 // pred_check_branch
          %167 = sbr.rel (%p165) target = $region24
        $region23: #{tpu_custom_call.1} parent=15 // pred_region
          %s168 = sand.u32 %s80, 1
          %s169 = scalar_lea.sflag [#allocation6], %s168
          %s170 = sand.u32 %s80, 1
          %s171 = smul.addr %s170, 8
          %s172 = scalar_lea.vmem [#allocation5], %s171
          %s173 = sadd.s32 %s24, %s26
          %s175 = ssub.s32 128, 128
          %176 = vsyncadd %s169, %s175
          %s177 = sadd.s32 %s173, %s25
          %s178 = smul.addr %s177, 128
          %s179 = scalar_lea.hbm %s1, %s178
          %s181 = sshll.u32 %s172, 4
          %s182 = int_to_ptr.vmem [resolvable:$true] %s181
          %184 = dma.hbm_to_vmem [thread:$0]  %s179, 128, %s182, %s169
        $region24: #{tpu_custom_call.1} parent=15 // pred_fallthru
          _
      $region16: #{tpu_custom_call.1} parent=5 // pred_fallthru
        _
      %p185 = scmp.le.s32.totalorder 1, %s17
      %p186 = scmp.lt.s32.totalorder %s17, 3
      %p187 = pnand %p185, %p186
      %p188 = pneg %p187
      // Predicated region
      $region25: #{tpu_custom_call.1} parent=5 // pred_check
        _
      $region26: #{tpu_custom_call.1} parent=5 // pred_check_branch
        %190 = sbr.rel (%p187) target = $region28
      $region27: #{tpu_custom_call.1} parent=5 // pred_region
        %s191 = ssub.s32 %s17, 1
        %s192 = sand.u32 %s53, 1
        %s193 = scalar_lea.sflag [#allocation3], %s192
        %s194 = sand.u32 %s53, 1
        %s195 = smul.addr %s194, 8
        %s196 = scalar_lea.vmem [#allocation2], %s195
        // Predicated region
        $region29: #{tpu_custom_call.1} parent=27 // pred_check
          %p197 = pneg %p66
        $region30: #{tpu_custom_call.1} parent=27 // pred_check_branch
          %199 = sbr.rel (%p197) target = $region32
        $region31: #{tpu_custom_call.1} parent=27 // pred_region
          %200 = dma.done %s193, 128
        $region32: #{tpu_custom_call.1} parent=27 // pred_fallthru
          _
        %s201 = sand.u32 %s83, 1
        %s202 = scalar_lea.sflag [#allocation6], %s201
        %s203 = sand.u32 %s83, 1
        %s204 = smul.addr %s203, 8
        %s205 = scalar_lea.vmem [#allocation5], %s204
        // Predicated region
        $region33: #{tpu_custom_call.1} parent=27 // pred_check
          %p206 = pneg %p96
        $region34: #{tpu_custom_call.1} parent=27 // pred_check_branch
          %208 = sbr.rel (%p206) target = $region36
        $region35: #{tpu_custom_call.1} parent=27 // pred_region
          %209 = dma.done %s202, 128
        $region36: #{tpu_custom_call.1} parent=27 // pred_fallthru
          _
        %s210 = sand.u32 %s53, 1
        %s211 = scalar_lea.sflag [#allocation3], %s210
        %s212 = sand.u32 %s53, 1
        %s213 = smul.addr %s212, 8
        %s214 = scalar_lea.vmem [#allocation2], %s213
        %p215 = pneg %p66
        %p216 = pneg %p63
        %s217 = sand.u32 %s83, 1
        %s218 = scalar_lea.sflag [#allocation6], %s217
        %s219 = sand.u32 %s83, 1
        %s220 = smul.addr %s219, 8
        %s221 = scalar_lea.vmem [#allocation5], %s220
        %p222 = pneg %p96
        %p223 = pneg %p93
        %p224 = pneg %p126
        %p225 = pneg %p123
        %s226 = sand.u32 %s113, 1
        %s227 = scalar_lea.sflag [#allocation4], %s226
        %s228 = sand.u32 %s113, 1
        %s229 = smul.addr %s228, 8
        %s230 = scalar_lea.vmem [#allocation7], %s229
        %s231 = sadd.s32 %s27, %s29
        %s232 = sadd.s32 %s27, %s29
        %s233 = smul.u32 %s27, 2
        %s234 = sadd.s32 %s233, %s28
        %p235 = scmp.eq.s32.totalorder %s29, 0
        // Predicated region
        $region37: #{tpu_custom_call.1} parent=27 // pred_check
          %p236 = pneg %p235
        $region38: #{tpu_custom_call.1} parent=27 // pred_check_branch
          %238 = sbr.rel (%p236) target = $region40
        $region39: #{tpu_custom_call.1} parent=27 // pred_region
          %239 = vst [vmem:[%s230] sm:$0xff] 0.0
        $region40: #{tpu_custom_call.1} parent=27 // pred_fallthru
          _
        %v240 = vld [vmem:[%s196] sm:$0xff]
        %v241 = vmax.f32 %v240, 1e-10
        %v242 = vmin.f32 %v241, 1.0
        %v243 = vld [vmem:[%s205] sm:$0xff]
        %v244 = vmul.f32 %v242, %v243
        %v245 = vsub.f32 1.0, %v242
        %v246 = vsub.f32 1.0, %v243
        %v247 = vmul.f32 %v245, %v246
        %v248 = vadd.f32 %v244, %v247
        %v249 = vsub.f32 1.0, %v248
        %v250 = vmul.f32 %v249, %v249
        %v251 = vlog2.pop %v242
        %v252 = vmul.f32 %v251, 0.6931472
        %v253 = vmul.f32 %v243, %v252
        %v254 = vlog2.pop %v245
        %v255 = vmul.f32 %v254, 0.6931472
        %v256 = vmul.f32 %v246, %v255
        %v257 = vadd.f32 %v253, %v256
        %v258 = vmul.f32 %v250, -1.0
        %v259 = vmul.f32 %v258, %v257
        %v260 = vld [vmem:[%s230] sm:$0xff]
        %v261 = vadd.f32 %v259, 0.0
        %v262 = vadd.f32 %v260, %v261
        %263 = vst [vmem:[%s230] sm:$0xff] %v262
        %s264 = sand.u32 %s113, 1
        %s265 = scalar_lea.sflag [#allocation4], %s264
        %s266 = sand.u32 %s113, 1
        %s267 = smul.addr %s266, 8
        %s268 = scalar_lea.vmem [#allocation7], %s267
        // Predicated region
        $region41: #{tpu_custom_call.1} parent=27 // pred_check
          %p269 = pneg %p123
        $region42: #{tpu_custom_call.1} parent=27 // pred_check_branch
          %271 = sbr.rel (%p269) target = $region44
        $region43: #{tpu_custom_call.1} parent=27 // pred_region
          %s272 = smul.u32 %s27, 2
          %s273 = sadd.s32 %s272, %s28
          %s275 = ssub.s32 128, 128
          %276 = vsyncadd %s265, %s275
          %s277 = smul.addr %s273, 128
          %s278 = scalar_lea.hbm %s2, %s277
          %s280 = sshll.u32 %s268, 4
          %s281 = int_to_ptr.vmem [resolvable:$true] %s280
          %283 = dma.vmem_to_hbm [thread:$0]  %s281, 128, %s278, %s265
        $region44: #{tpu_custom_call.1} parent=27 // pred_fallthru
          _
      $region28: #{tpu_custom_call.1} parent=5 // pred_fallthru
        _
      %p284 = scmp.le.s32.totalorder 2, %s17
      // Predicated region
      $region45: #{tpu_custom_call.1} parent=5 // pred_check
        %p285 = pneg %p284
      $region46: #{tpu_custom_call.1} parent=5 // pred_check_branch
        %287 = sbr.rel (%p285) target = $region48
      $region47: #{tpu_custom_call.1} parent=5 // pred_region
        %s288 = ssub.s32 %s17, 2
        // Predicated region
        $region49: #{tpu_custom_call.1} parent=47 // pred_check
          %p289 = pneg %p129
        $region50: #{tpu_custom_call.1} parent=47 // pred_check_branch
          %291 = sbr.rel (%p289) target = $region52
        $region51: #{tpu_custom_call.1} parent=47 // pred_region
          %s292 = sand.u32 %s114, 1
          %s293 = scalar_lea.sflag [#allocation4], %s292
          %s294 = sand.u32 %s114, 1
          %s295 = smul.addr %s294, 8
          %s296 = scalar_lea.vmem [#allocation7], %s295
          %297 = dma.done %s293, 128
        $region52: #{tpu_custom_call.1} parent=47 // pred_fallthru
          _
      $region48: #{tpu_custom_call.1} parent=5 // pred_fallthru
        _
    $region6: #{tpu_custom_call.1} parent=1 // loop_footer
      %s21 = sadd.s32 1, %s17
    $region7: #{tpu_custom_call.1} parent=1 // loop_footer_branch
      %16 = sbr.rel target = $region3
    $region8: #{tpu_custom_call.1} parent=1 // loop_exit
      _
    %298 = vsyncpa [#allocation3], 1
    %s299 = scalar_lea.sflag [#allocation3], 1
    %300 = vsyncpa %s299, 1
    %301 = vsyncpa [#allocation6], 1
    %s302 = scalar_lea.sflag [#allocation6], 1
    %303 = vsyncpa %s302, 1
    %304 = vsyncpa [#allocation4], 1
    %s305 = scalar_lea.sflag [#allocation4], 1
    %306 = vsyncpa %s305, 1

</llo_original>
